<compile_context>
chip_gen: v7x
topology: tpu7x:2x2x1
jax: 0.10.0
libtpu: 0.0.40
codegen_flags: <defaults>
</compile_context>

<pallas_src>
import functools

import jax
import jax.numpy as jnp
from jax.experimental import pallas as pl
from jax.experimental.pallas import tpu as pltpu


def _final_up_kernel(x_ref, w_ref, g_ref, b_ref, r_ref, s_ref, o_ref, *, eps):
    """One token tile: bf16 expand matmul + MXU-factored per-group LayerNorm.

    x_ref: (tm, C)        bf16 input tokens
    w_ref: (C, out_c)     bf16 expand weight (== torch Linear weight.T)
    g_ref: (1, out_c)     f32 LayerNorm gamma, tiled ds^2 times
    b_ref: (1, out_c)     f32 LayerNorm beta,  tiled ds^2 times
    r_ref: (out_c, ds^2)  f32 per-group averaging (reduce) matrix, entries 1/C
    s_ref: (ds^2, out_c)  f32 per-group broadcast (scatter) matrix, one-hot
    o_ref: (tm, out_c)    normalized expanded tokens (single lane-dense store)
    """
    # MXU: (tm, C) @ (C, out_c) -> (tm, out_c), f32 accumulation.
    y = jnp.dot(x_ref[...], w_ref[...], preferred_element_type=jnp.float32)

    r = r_ref[...]
    s = s_ref[...]
    # Per-group (size C) mean via two narrow MXU matmuls: reduce each group to
    # one of ds^2 lanes, then broadcast the result back across the group's
    # lanes. No masked XLU lane reductions, no (out_c, out_c) matrix.
    mu = jnp.dot(jnp.dot(y, r, preferred_element_type=jnp.float32), s,
                 preferred_element_type=jnp.float32)
    cen = y - mu
    # Centered variance: robust against catastrophic cancellation.
    var = jnp.dot(jnp.dot(cen * cen, r, preferred_element_type=jnp.float32), s,
                  preferred_element_type=jnp.float32)
    inv = jax.lax.rsqrt(var + eps)                      # EUP slot (free-ish)

    # One lane-dense (tm, out_c) store.
    o_ref[...] = (cen * inv * g_ref[...] + b_ref[...]).astype(o_ref.dtype)


def final_up_tokens(x_tok, w_expand, gamma, beta, *, dim_scale=2, eps=1e-5,
                    tm=2048, out_dtype=jnp.float32):
    """Expand + per-group LayerNorm on token-major (channels-last) data.

    x_tok:    (n_tok, C)   tokens in (b, h, w) order, channels last
    w_expand: (C, C*ds^2)  expand weight (torch weight.T)
    gamma/beta: (C,)       LayerNorm params
    returns:  (n_tok, C*ds^2) with channels ordered (p1, p2, c) (pre-shuffle)
    """
    n_tok, C = x_tok.shape
    ds2 = dim_scale * dim_scale
    out_c = C * ds2
    out_itemsize = jnp.dtype(out_dtype).itemsize

    # --- tile sizing -------------------------------------------------------
    # Rough per-token VMEM footprint: double-buffered bf16 input, double-
    # buffered output, ~5 live f32 (tm, out_c) temporaries. Keep under ~12 MiB
    # so the default scoped VMEM limit is safe on v5e (16 MiB) / v6e / v7x.
    bytes_per_tok = 2 * C * 2 + 2 * out_c * out_itemsize + 5 * out_c * 4
    tm_budget = max(16, int((12 * 1024 * 1024) // bytes_per_tok))
    tm = max(16, min(tm, tm_budget, n_tok))
    # Keep >= 4 grid steps when there is enough work: >= 2 steps per
    # TensorCore on v7x megacore so double-buffering has something to overlap.
    if n_tok >= 4 * 16 and pl.cdiv(n_tok, tm) < 4:
        tm = pl.cdiv(n_tok, 4)
    tm = ((tm + 15) // 16) * 16          # bf16 native sublane tiling is (16,128)
    grid = (pl.cdiv(n_tok, tm),)         # ragged tail handled by Pallas masking

    x_bf16 = x_tok.astype(jnp.bfloat16)  # halves the HBM read stream; f32 acc
    w_bf16 = w_expand.astype(jnp.bfloat16)

    # LayerNorm params tiled to the expanded width -> one full-width store.
    gamma_t = jnp.tile(gamma.astype(jnp.float32), ds2).reshape(1, out_c)
    beta_t = jnp.tile(beta.astype(jnp.float32), ds2).reshape(1, out_c)

    # Factored per-group averaging: r reduces each size-C group to one of ds^2
    # columns (entries 1/C), s scatters the group value back across its lanes.
    grp = jnp.arange(out_c) // C
    r_mat = (grp[:, None] == jnp.arange(ds2)[None, :]).astype(jnp.float32) / C
    s_mat = (jnp.arange(ds2)[:, None] == grp[None, :]).astype(jnp.float32)

    cost = pl.CostEstimate(
        flops=int(2 * n_tok * C * out_c            # expand matmul
                  + 8 * n_tok * out_c * ds2        # factored stats matmuls
                  + 6 * n_tok * out_c),            # elementwise normalize
        transcendentals=int(n_tok * out_c),        # rsqrt (broadcast shape)
        bytes_accessed=int(n_tok * C * 2 + n_tok * out_c * out_itemsize
                           + C * out_c * 2 + (2 + 2 * ds2) * out_c * 4),
    )

    kernel = functools.partial(_final_up_kernel, eps=eps)
    return pl.pallas_call(
        kernel,
        out_shape=jax.ShapeDtypeStruct((n_tok, out_c), out_dtype),
        grid_spec=pltpu.PrefetchScalarGridSpec(
            num_scalar_prefetch=0,
            grid=grid,
            in_specs=[
                pl.BlockSpec((tm, C), lambda i: (i, 0)),         # tokens
                pl.BlockSpec((C, out_c), lambda i: (0, 0)),      # expand weight
                pl.BlockSpec((1, out_c), lambda i: (0, 0)),      # gamma (tiled)
                pl.BlockSpec((1, out_c), lambda i: (0, 0)),      # beta  (tiled)
                pl.BlockSpec((out_c, ds2), lambda i: (0, 0)),    # reduce matrix
                pl.BlockSpec((ds2, out_c), lambda i: (0, 0)),    # broadcast matrix
            ],
            out_specs=pl.BlockSpec((tm, out_c), lambda i: (i, 0)),
        ),
        compiler_params=pltpu.CompilerParams(
            dimension_semantics=("parallel",)),
        cost_estimate=cost,
    )(x_bf16, w_bf16, gamma_t, beta_t, r_mat, s_mat)


@functools.partial(jax.jit,
                   static_argnames=("dim_scale", "eps", "tm", "out_dtype"))
def final_up(x, w_expand, gamma, beta, *, dim_scale=2, eps=1e-5, tm=2048,
             out_dtype=jnp.float32):
    """JAX/Pallas implementation of Final_Up.forward (NCHW in, NCHW out).

    x:        (B, C, H, W)   NCHW, matching the PyTorch module
    w_expand: (C, C*ds^2)    expand weight (== torch_linear.weight.T)
    gamma:    (C,)           LayerNorm weight
    beta:     (C,)           LayerNorm bias
    returns:  (B, C, H*ds, W*ds) in out_dtype (f32 default; bf16 optional)
    """
    B, C, H, W = x.shape
    ds = dim_scale
    n_tok = B * H * W

    # NCHW -> token-major (n_tok, C). Kept under the same jit as the kernel so
    # XLA fuses the layout plumbing around the custom call. Channels-last
    # callers should use final_up_tokens directly and skip both transposes.
    x_tok = jnp.transpose(x, (0, 2, 3, 1)).reshape(n_tok, C)
    y = final_up_tokens(x_tok, w_expand, gamma, beta, dim_scale=ds, eps=eps,
                        tm=tm, out_dtype=out_dtype)

    # pixel-shuffle 'b h w (p1 p2 c) -> b (h p1) (w p2) c' + NHWC->NCHW,
    # collapsed into ONE transpose: (b,h,w,p1,p2,c) -> (b,c,h,p1,w,p2).
    y = y.reshape(B, H, W, ds, ds, C)
    return jnp.transpose(y, (0, 5, 1, 3, 2, 4)).reshape(B, C, H * ds, W * ds)


def _reference(x, w_expand, gamma, beta, dim_scale=2, eps=1e-5):
    """Pure-JAX (f32) reference of the PyTorch forward."""
    B, C, H, W = x.shape
    ds = dim_scale
    xt = jnp.transpose(x, (0, 2, 3, 1)).reshape(B, H * W, C)
    xt = xt @ w_expand                                     # (B, L, C*ds^2)
    xt = xt.reshape(B, H, W, ds, ds, C)
    xt = jnp.transpose(xt, (0, 1, 3, 2, 4, 5)).reshape(B, H * ds, W * ds, C)
    mu = jnp.mean(xt, axis=-1, keepdims=True)
    var = jnp.mean((xt - mu) ** 2, axis=-1, keepdims=True)
    xt = (xt - mu) * jax.lax.rsqrt(var + eps) * gamma + beta
    return jnp.transpose(xt, (0, 3, 1, 2))


if __name__ == "__main__":
    dim_scale = 2

    def run_case(B, C, H, W, key):
        kx, kw, kg, kb = jax.random.split(key, 4)
        x = jax.random.normal(kx, (B, C, H, W), dtype=jnp.float32)
        # nn.Linear(dim, dim*ds^2, bias=False): torch weight is (out, in); we
        # keep its transpose (in, out) so the kernel does x @ W.
        w = jax.random.normal(kw, (C, C * dim_scale ** 2), dtype=jnp.float32) * 0.02
        # Non-trivial LayerNorm params to exercise the tiled gamma/beta path.
        gamma = 1.0 + 0.1 * jax.random.normal(kg, (C,), dtype=jnp.float32)
        beta = 0.1 * jax.random.normal(kb, (C,), dtype=jnp.float32)

        out = jax.block_until_ready(
            final_up(x, w, gamma, beta, dim_scale=dim_scale))
        assert out.shape == (B, C, H * dim_scale, W * dim_scale), out.shape

        # Tight check vs a reference fed the same bf16-rounded matmul inputs
        # (isolates kernel logic from the intentional bf16 quantization).
        x_r = x.astype(jnp.bfloat16).astype(jnp.float32)
        w_r = w.astype(jnp.bfloat16).astype(jnp.float32)
        ref_bf = _reference(x_r, w_r, gamma, beta, dim_scale=dim_scale)
        assert jnp.allclose(out, ref_bf, atol=2e-4, rtol=2e-4), (
            float(jnp.max(jnp.abs(out - ref_bf))))

        # Loose check vs the pure-f32 reference (bf16 matmul inputs -> drift).
        ref_f32 = _reference(x, w, gamma, beta, dim_scale=dim_scale)
        err = float(jnp.max(jnp.abs(out - ref_f32)))
        assert err < 5e-2, err
        return x, w, gamma, beta, ref_f32

    key = jax.random.PRNGKey(0)
    k1, k2 = jax.random.split(key)

    # Primary shape: dim (=C) = 32, 16x16 spatial, batch 2 -> 512 tokens,
    # 4 grid steps of 128 tokens.
    x, w, gamma, beta, ref_f32 = run_case(2, 32, 16, 16, k1)

    # Ragged-tail shape: 120 tokens do not divide the 32-token tile, so the
    # masked last block is exercised (no jnp.pad in the wrapper anymore).
    run_case(1, 32, 10, 12, k2)

    # Optional bf16-output fast path (halves the dominant HBM write stream).
    out_bf = jax.block_until_ready(
        final_up(x, w, gamma, beta, dim_scale=dim_scale,
                 out_dtype=jnp.bfloat16))
    assert out_bf.dtype == jnp.bfloat16
    err_bf = float(jnp.max(jnp.abs(out_bf.astype(jnp.float32) - ref_f32)))
    assert err_bf < 1e-1, err_bf

    print("KERNEL_OK")
</pallas_src>

<mosaic_0001>
module attributes {stable_mosaic.version = 11 : i64} {
  func.func @_final_up_kernel(%arg0: i32, %arg1: memref<128x32xbf16, #tpu.memory_space<vmem>>, %arg2: memref<32x128xbf16, #tpu.memory_space<vmem>>, %arg3: memref<1x128xf32, #tpu.memory_space<vmem>>, %arg4: memref<1x128xf32, #tpu.memory_space<vmem>>, %arg5: memref<128x4xf32, #tpu.memory_space<vmem>>, %arg6: memref<4x128xf32, #tpu.memory_space<vmem>>, %arg7: memref<128x128xf32, #tpu.memory_space<vmem>>) attributes {dimension_semantics = [#tpu.dimension_semantics<parallel>], iteration_bounds = array<i64: 4>, scalar_prefetch = 0 : i64, scratch_operands = 0 : i64, tpu.core_type = #tpu.core_type<tc>, window_params = [{transform_indices = @transform_0, window_bounds = array<i64: 128, 32>}, {pipeline_mode = #tpu.pipeline_mode<synchronous>, transform_indices = @transform_1, window_bounds = array<i64: 32, 128>}, {pipeline_mode = #tpu.pipeline_mode<synchronous>, transform_indices = @transform_2, window_bounds = array<i64: 1, 128>}, {pipeline_mode = #tpu.pipeline_mode<synchronous>, transform_indices = @transform_3, window_bounds = array<i64: 1, 128>}, {pipeline_mode = #tpu.pipeline_mode<synchronous>, transform_indices = @transform_4, window_bounds = array<i64: 128, 4>}, {pipeline_mode = #tpu.pipeline_mode<synchronous>, transform_indices = @transform_5, window_bounds = array<i64: 4, 128>}, {transform_indices = @transform_6, window_bounds = array<i64: 128, 128>}]} {
    %c0 = arith.constant 0 : index
    %c0_0 = arith.constant 0 : index
    %0 = vector.load %arg1[%c0, %c0_0] : memref<128x32xbf16, #tpu.memory_space<vmem>>, vector<128x32xbf16>
    %c0_1 = arith.constant 0 : index
    %c0_2 = arith.constant 0 : index
    %1 = vector.load %arg2[%c0_1, %c0_2] : memref<32x128xbf16, #tpu.memory_space<vmem>>, vector<32x128xbf16>
    %cst = arith.constant dense<0.000000e+00> : vector<128x128xf32>
    %2 = tpu.matmul %0, %1, %cst {dimension_numbers = #tpu.dot_dimension_numbers<[1], [0], [0], [1], [0, 0, 1, 1], [], []>} : vector<128x32xbf16>, vector<32x128xbf16>, vector<128x128xf32> -> vector<128x128xf32>
    %c0_3 = arith.constant 0 : index
    %c0_4 = arith.constant 0 : index
    %3 = vector.load %arg5[%c0_3, %c0_4] : memref<128x4xf32, #tpu.memory_space<vmem>>, vector<128x4xf32>
    %c0_5 = arith.constant 0 : index
    %c0_6 = arith.constant 0 : index
    %4 = vector.load %arg6[%c0_5, %c0_6] : memref<4x128xf32, #tpu.memory_space<vmem>>, vector<4x128xf32>
    %cst_7 = arith.constant dense<0.000000e+00> : vector<128x4xf32>
    %5 = tpu.matmul %2, %3, %cst_7 {dimension_numbers = #tpu.dot_dimension_numbers<[1], [0], [0], [1], [0, 0, 1, 1], [], []>} : vector<128x128xf32>, vector<128x4xf32>, vector<128x4xf32> -> vector<128x4xf32>
    %cst_8 = arith.constant dense<0.000000e+00> : vector<128x128xf32>
    %6 = tpu.matmul %5, %4, %cst_8 {dimension_numbers = #tpu.dot_dimension_numbers<[1], [0], [0], [1], [0, 0, 1, 1], [], []>} : vector<128x4xf32>, vector<4x128xf32>, vector<128x128xf32> -> vector<128x128xf32>
    %7 = arith.subf %2, %6 : vector<128x128xf32>
    %8 = arith.mulf %7, %7 : vector<128x128xf32>
    %cst_9 = arith.constant dense<0.000000e+00> : vector<128x4xf32>
    %9 = tpu.matmul %8, %3, %cst_9 {dimension_numbers = #tpu.dot_dimension_numbers<[1], [0], [0], [1], [0, 0, 1, 1], [], []>} : vector<128x128xf32>, vector<128x4xf32>, vector<128x4xf32> -> vector<128x4xf32>
    %cst_10 = arith.constant dense<0.000000e+00> : vector<128x128xf32>
    %10 = tpu.matmul %9, %4, %cst_10 {dimension_numbers = #tpu.dot_dimension_numbers<[1], [0], [0], [1], [0, 0, 1, 1], [], []>} : vector<128x4xf32>, vector<4x128xf32>, vector<128x128xf32> -> vector<128x128xf32>
    %cst_11 = arith.constant 9.99999974E-6 : f32
    %11 = vector.broadcast %cst_11 : f32 to vector<128x128xf32>
    %12 = arith.addf %10, %11 : vector<128x128xf32>
    %13 = math.rsqrt %12 : vector<128x128xf32>
    %14 = arith.mulf %7, %13 : vector<128x128xf32>
    %c0_12 = arith.constant 0 : index
    %c0_13 = arith.constant 0 : index
    %15 = vector.load %arg3[%c0_12, %c0_13] : memref<1x128xf32, #tpu.memory_space<vmem>>, vector<1x128xf32>
    %16 = vector.broadcast %15 : vector<1x128xf32> to vector<128x128xf32>
    %17 = arith.mulf %14, %16 : vector<128x128xf32>
    %c0_14 = arith.constant 0 : index
    %c0_15 = arith.constant 0 : index
    %18 = vector.load %arg4[%c0_14, %c0_15] : memref<1x128xf32, #tpu.memory_space<vmem>>, vector<1x128xf32>
    %19 = vector.broadcast %18 : vector<1x128xf32> to vector<128x128xf32>
    %20 = arith.addf %17, %19 : vector<128x128xf32>
    %c0_16 = arith.constant 0 : index
    %c0_17 = arith.constant 0 : index
    %21 = vector.load %arg7[%c0_16, %c0_17] : memref<128x128xf32, #tpu.memory_space<vmem>>, vector<128x128xf32>
    tpu.vector_store %arg7[%c0_16, %c0_17], %20 {strides = array<i32>} : memref<128x128xf32, #tpu.memory_space<vmem>>, vector<128x128xf32>,
    return
  }
  func.func @transform_0(%arg0: i32) -> (i32, i32) {
    %c0_i32 = arith.constant 0 : i32
    %c0_i32_0 = arith.constant 0 : i32
    return %arg0, %c0_i32 : i32, i32
  }
  func.func @transform_1(%arg0: i32) -> (i32, i32) {
    %c0_i32 = arith.constant 0 : i32
    %c0_i32_0 = arith.constant 0 : i32
    %c0_i32_1 = arith.constant 0 : i32
    return %c0_i32, %c0_i32_0 : i32, i32
  }
  func.func @transform_2(%arg0: i32) -> (i32, i32) {
    %c0_i32 = arith.constant 0 : i32
    %c0_i32_0 = arith.constant 0 : i32
    %c0_i32_1 = arith.constant 0 : i32
    return %c0_i32, %c0_i32_0 : i32, i32
  }
  func.func @transform_3(%arg0: i32) -> (i32, i32) {
    %c0_i32 = arith.constant 0 : i32
    %c0_i32_0 = arith.constant 0 : i32
    %c0_i32_1 = arith.constant 0 : i32
    return %c0_i32, %c0_i32_0 : i32, i32
  }
  func.func @transform_4(%arg0: i32) -> (i32, i32) {
    %c0_i32 = arith.constant 0 : i32
    %c0_i32_0 = arith.constant 0 : i32
    %c0_i32_1 = arith.constant 0 : i32
    return %c0_i32, %c0_i32_0 : i32, i32
  }
  func.func @transform_5(%arg0: i32) -> (i32, i32) {
    %c0_i32 = arith.constant 0 : i32
    %c0_i32_0 = arith.constant 0 : i32
    %c0_i32_1 = arith.constant 0 : i32
    return %c0_i32, %c0_i32_0 : i32, i32
  }
  func.func @transform_6(%arg0: i32) -> (i32, i32) {
    %c0_i32 = arith.constant 0 : i32
    %c0_i32_0 = arith.constant 0 : i32
    return %arg0, %c0_i32 : i32, i32
  }
}

</mosaic_0001>

<llo_original>
// kernel: tile.13
$region0: #{tile.13}
  #allocation0 [shape = 's32[1]{0}', space=sflag, size = 0x4, scoped, tag = 'scoped memory for tile.13']
  %s0 = inlined_call_operand.vmem [shape: f32[32], index: 0, kind: input, shape index: {}]
  %s1 = inlined_call_operand.vmem [shape: f32[4,32], index: 1, kind: output, shape index: {}]
  // Predicated region
  $region2: #{tile.13} parent=0 // pred_check
    _
  $region3: #{tile.13} parent=0 // pred_check_branch
    %3 = sbr.rel (0) target = $region5
  $region4: #{tile.13} parent=0 // pred_region
    _
  $region5: #{tile.13} parent=0 // pred_fallthru
    _
  %v4 = vld [vmem:[%s0] ss:$0 sm:$0xff]
  %5 = vst [vmem:[%s1] sm:$0xf] %v4

// kernel: tile.14
$region0: #{tile.14}
  %s0 = inlined_call_operand.vmem [shape: f32[4,32], index: 0, kind: input, shape index: {}]
  %s1 = inlined_call_operand.vmem [shape: f32[1,128], index: 1, kind: output, shape index: {}]
  $region1: #{tile.14} parent=0
    #allocation0 [shape = 'u8[4096]{0}', space=vmem, size = 0x1000, scoped, tag = 'scoped mem for output reshape']
    #allocation1 [shape = 'u8[4096]{0}', space=vmem, size = 0x1000, scoped, tag = 'scoped mem for input reshape']
    %s3 = sshllo.u32 0, 4
    %v4 = vld [vmem:[%s0] sm:%s3]
    %5 = vst [vmem:[#allocation1] sm:%s3] %v4
    %v6 = vld [vmem:[#allocation1] sm:$0x1]
    %vm7 = vcmask 261120
    %8 = vst.msk [vmem:[#allocation0] sm:$0x1] %vm7, %v6
    %s9 = scalar_lea.vmem [#allocation1], 3
    %v10 = vld [vmem:[%s9] sm:$0x1]
    %11 = vrot.lane.b32.xlu0 %v10, 96
    %v12 = vpop.permute.xlu0 %11
    %vm13 = vcmask 1048320
    %14 = vst.msk [vmem:[#allocation0] sm:$0x1] %vm13, %v12
    %s15 = scalar_lea.vmem [#allocation1], 2
    %v16 = vld [vmem:[%s15] sm:$0x1]
    %17 = vrot.lane.b32.xlu0 %v16, 64
    %v18 = vpop.permute.xlu0 %17
    %vm19 = vcmask 785920
    %20 = vst.msk [vmem:[#allocation0] sm:$0x1] %vm19, %v18
    %s21 = scalar_lea.vmem [#allocation1], 1
    %v22 = vld [vmem:[%s21] sm:$0x1]
    %23 = vrot.lane.b32.xlu0 %v22, 32
    %v24 = vpop.permute.xlu0 %23
    %vm25 = vcmask 523520
    %26 = vst.msk [vmem:[#allocation0] sm:$0x1] %vm25, %v24
    %s28 = sshllo.u32 0, 1
    %v30 = vld [vmem:[#allocation0] sm:%s28]
    %s31 = sshllo.u32 0, 1
    %32 = vst [vmem:[%s1] sm:%s31] %v30

// kernel: final_up.1
$region0: #{final_up.1}
  #allocation0 [shape = 'u32[]', space=smem, size = 0x4, offset = 0x4, fixed_abs, tag = 'smem constant byte address 0x4 - core index']
  #allocation1 [shape = 'u32[144,128]{1,0:T(1,128)}', space=vmem, size = 0x12000, scoped, tag = 'internal scratch']
  %s0 = inlined_call_operand.vmem [shape: bf16[512,32], index: 0, kind: input, shape index: {}]
  %s1 = inlined_call_operand.vmem [shape: bf16[32,128], index: 1, kind: input, shape index: {}]
  %s2 = inlined_call_operand.vmem [shape: f32[1,128], index: 2, kind: input, shape index: {}]
  %s3 = inlined_call_operand.vmem [shape: f32[1,128], index: 3, kind: input, shape index: {}]
  %s4 = inlined_call_operand.vmem [shape: f32[128,4], index: 4, kind: input, shape index: {}]
  %s5 = inlined_call_operand.vmem [shape: f32[4,128], index: 5, kind: input, shape index: {}]
  %s6 = inlined_call_operand.vmem [shape: f32[512,128], index: 6, kind: output, shape index: {}]
  %s7 = sld [smem:[#allocation0]]
  $region57: #{final_up.1} parent=0
    _
  %s9 = ssub.s32 1, %s7
  %s10 = scalar_select 0, %s9, %s7
  loop: start=0, step=1, limit=6
  $region2: #{final_up.1} parent=0 // loop_pre_header
    _
  $region3: #{final_up.1} parent=0 // loop_header
    %s12 = sphi 0, %s16
    %p13 = scmp.ge.s32.totalorder %s12, 6
    %s22 = sphi 0, %s24
    %s25 = sphi 0, %s22
    %s26 = sphi 0, %s25
    %s42 = sphi 0, %s26
    %s46 = sphi 0, %s46
    %s48 = sphi 0, %s46
    %s49 = sphi 0, %s48
    %s63 = sphi 0, %s49
    %s67 = sphi 0, %s67
    %s69 = sphi 0, %s67
    %s70 = sphi 0, %s69
    %s84 = sphi 0, %s70
    %s88 = sphi 0, %s88
    %s90 = sphi 0, %s88
    %s91 = sphi 0, %s90
    %s105 = sphi 0, %s91
    %s109 = sphi 0, %s109
    %s111 = sphi 0, %s109
    %s112 = sphi 0, %s111
    %s126 = sphi 0, %s112
    %s130 = sphi 0, %s130
    %s132 = sphi 0, %s130
    %s133 = sphi 0, %s132
    %s147 = sphi 0, %s133
    %s153 = sphi 0, %s155
    %s156 = sphi 0, %s153
    %s157 = sphi 0, %s156
    %s173 = sphi 0, %s157
  $region4: #{final_up.1} parent=0 // loop_header_branch
    %15 = sbr.rel (%p13) target = $region8
  $region5: #{final_up.1} parent=0 // loop_body
    %s17 = ssub.s32 %s12, 1
    %s18 = ssub.s32 %s12, 2
    %s19 = sadd.s32 %s12, 1
    %s20 = ssub.s32 %s12, %s19
    %p21 = scmp.eq.s32.totalorder %s20, 0
    %s23 = sadd.s32 %s22, 1
    %s24 = scalar_select %p21, %s22, %s23
    %p27 = pneg %p21
    %p28 = scmp.eq.s32.totalorder %s12, 3
    %p29 = por %p27, %p28
    %p30 = scmp.ne.s32.totalorder %s22, %s25
    %p31 = scmp.eq.s32.totalorder %s12, 0
    %p32 = por %p30, %p31
    %p33 = scmp.ne.s32.totalorder %s22, %s25
    %p34 = scmp.eq.s32.totalorder %s17, 3
    %p35 = por %p33, %p34
    %p36 = scmp.ne.s32.totalorder %s25, %s26
    %p37 = scmp.eq.s32.totalorder %s17, 0
    %p38 = por %p36, %p37
    %p39 = scmp.ne.s32.totalorder %s25, %s26
    %p40 = scmp.eq.s32.totalorder %s18, 3
    %p41 = por %p39, %p40
    %p43 = scmp.ne.s32.totalorder %s26, %s42
    %p44 = scmp.eq.s32.totalorder %s18, 0
    %p45 = por %p43, %p44
    %s47 = sadd.s32 %s46, 1
    %p50 = scmp.eq.s32.totalorder %s12, 3
    %p51 = scmp.ne.s32.totalorder %s46, %s48
    %p52 = scmp.eq.s32.totalorder %s12, 0
    %p53 = por %p51, %p52
    %p54 = scmp.ne.s32.totalorder %s46, %s48
    %p55 = scmp.eq.s32.totalorder %s17, 3
    %p56 = por %p54, %p55
    %p57 = scmp.ne.s32.totalorder %s48, %s49
    %p58 = scmp.eq.s32.totalorder %s17, 0
    %p59 = por %p57, %p58
    %p60 = scmp.ne.s32.totalorder %s48, %s49
    %p61 = scmp.eq.s32.totalorder %s18, 3
    %p62 = por %p60, %p61
    %p64 = scmp.ne.s32.totalorder %s49, %s63
    %p65 = scmp.eq.s32.totalorder %s18, 0
    %p66 = por %p64, %p65
    %s68 = sadd.s32 %s67, 1
    %p71 = scmp.eq.s32.totalorder %s12, 3
    %p72 = scmp.ne.s32.totalorder %s67, %s69
    %p73 = scmp.eq.s32.totalorder %s12, 0
    %p74 = por %p72, %p73
    %p75 = scmp.ne.s32.totalorder %s67, %s69
    %p76 = scmp.eq.s32.totalorder %s17, 3
    %p77 = por %p75, %p76
    %p78 = scmp.ne.s32.totalorder %s69, %s70
    %p79 = scmp.eq.s32.totalorder %s17, 0
    %p80 = por %p78, %p79
    %p81 = scmp.ne.s32.totalorder %s69, %s70
    %p82 = scmp.eq.s32.totalorder %s18, 3
    %p83 = por %p81, %p82
    %p85 = scmp.ne.s32.totalorder %s70, %s84
    %p86 = scmp.eq.s32.totalorder %s18, 0
    %p87 = por %p85, %p86
    %s89 = sadd.s32 %s88, 1
    %p92 = scmp.eq.s32.totalorder %s12, 3
    %p93 = scmp.ne.s32.totalorder %s88, %s90
    %p94 = scmp.eq.s32.totalorder %s12, 0
    %p95 = por %p93, %p94
    %p96 = scmp.ne.s32.totalorder %s88, %s90
    %p97 = scmp.eq.s32.totalorder %s17, 3
    %p98 = por %p96, %p97
    %p99 = scmp.ne.s32.totalorder %s90, %s91
    %p100 = scmp.eq.s32.totalorder %s17, 0
    %p101 = por %p99, %p100
    %p102 = scmp.ne.s32.totalorder %s90, %s91
    %p103 = scmp.eq.s32.totalorder %s18, 3
    %p104 = por %p102, %p103
    %p106 = scmp.ne.s32.totalorder %s91, %s105
    %p107 = scmp.eq.s32.totalorder %s18, 0
    %p108 = por %p106, %p107
    %s110 = sadd.s32 %s109, 1
    %p113 = scmp.eq.s32.totalorder %s12, 3
    %p114 = scmp.ne.s32.totalorder %s109, %s111
    %p115 = scmp.eq.s32.totalorder %s12, 0
    %p116 = por %p114, %p115
    %p117 = scmp.ne.s32.totalorder %s109, %s111
    %p118 = scmp.eq.s32.totalorder %s17, 3
    %p119 = por %p117, %p118
    %p120 = scmp.ne.s32.totalorder %s111, %s112
    %p121 = scmp.eq.s32.totalorder %s17, 0
    %p122 = por %p120, %p121
    %p123 = scmp.ne.s32.totalorder %s111, %s112
    %p124 = scmp.eq.s32.totalorder %s18, 3
    %p125 = por %p123, %p124
    %p127 = scmp.ne.s32.totalorder %s112, %s126
    %p128 = scmp.eq.s32.totalorder %s18, 0
    %p129 = por %p127, %p128
    %s131 = sadd.s32 %s130, 1
    %p134 = scmp.eq.s32.totalorder %s12, 3
    %p135 = scmp.ne.s32.totalorder %s130, %s132
    %p136 = scmp.eq.s32.totalorder %s12, 0
    %p137 = por %p135, %p136
    %p138 = scmp.ne.s32.totalorder %s130, %s132
    %p139 = scmp.eq.s32.totalorder %s17, 3
    %p140 = por %p138, %p139
    %p141 = scmp.ne.s32.totalorder %s132, %s133
    %p142 = scmp.eq.s32.totalorder %s17, 0
    %p143 = por %p141, %p142
    %p144 = scmp.ne.s32.totalorder %s132, %s133
    %p145 = scmp.eq.s32.totalorder %s18, 3
    %p146 = por %p144, %p145
    %p148 = scmp.ne.s32.totalorder %s133, %s147
    %p149 = scmp.eq.s32.totalorder %s18, 0
    %p150 = por %p148, %p149
    %s151 = ssub.s32 %s12, %s19
    %p152 = scmp.eq.s32.totalorder %s151, 0
    %s154 = sadd.s32 %s153, 1
    %s155 = scalar_select %p152, %s153, %s154
    %p158 = pneg %p152
    %p159 = scmp.eq.s32.totalorder %s12, 3
    %p160 = por %p158, %p159
    %p161 = scmp.ne.s32.totalorder %s153, %s156
    %p162 = scmp.eq.s32.totalorder %s12, 0
    %p163 = por %p161, %p162
    %p164 = scmp.ne.s32.totalorder %s153, %s156
    %p165 = scmp.eq.s32.totalorder %s17, 3
    %p166 = por %p164, %p165
    %p167 = scmp.ne.s32.totalorder %s156, %s157
    %p168 = scmp.eq.s32.totalorder %s17, 0
    %p169 = por %p167, %p168
    %p170 = scmp.ne.s32.totalorder %s156, %s157
    %p171 = scmp.eq.s32.totalorder %s18, 3
    %p172 = por %p170, %p171
    %p174 = scmp.ne.s32.totalorder %s157, %s173
    %p175 = scmp.eq.s32.totalorder %s18, 0
    %p176 = por %p174, %p175
    %p177 = scmp.le.s32.totalorder 1, %s12
    %p178 = scmp.lt.s32.totalorder %s12, 5
    %p179 = pnand %p177, %p178
    %p180 = pneg %p179
    // Predicated region
    $region9: #{final_up.1} parent=5 // pred_check
      _
    $region10: #{final_up.1} parent=5 // pred_check_branch
      %182 = sbr.rel (%p179) target = $region12
    $region11: #{final_up.1} parent=5 // pred_region
      %s183 = ssub.s32 %s12, 1
      // Predicated region
      $region13: #{final_up.1} parent=11 // pred_check
        %p184 = pneg %p59
      $region14: #{final_up.1} parent=11 // pred_check_branch
        %186 = sbr.rel (%p184) target = $region16
      $region15: #{final_up.1} parent=11 // pred_region
        _
      $region16: #{final_up.1} parent=11 // pred_fallthru
        _
      // Predicated region
      $region17: #{final_up.1} parent=11 // pred_check
        %p187 = pneg %p80
      $region18: #{final_up.1} parent=11 // pred_check_branch
        %189 = sbr.rel (%p187) target = $region20
      $region19: #{final_up.1} parent=11 // pred_region
        _
      $region20: #{final_up.1} parent=11 // pred_fallthru
        _
      // Predicated region
      $region21: #{final_up.1} parent=11 // pred_check
        %p190 = pneg %p101
      $region22: #{final_up.1} parent=11 // pred_check_branch
        %192 = sbr.rel (%p190) target = $region24
      $region23: #{final_up.1} parent=11 // pred_region
        _
      $region24: #{final_up.1} parent=11 // pred_fallthru
        _
      // Predicated region
      $region25: #{final_up.1} parent=11 // pred_check
        %p193 = pneg %p122
      $region26: #{final_up.1} parent=11 // pred_check_branch
        %195 = sbr.rel (%p193) target = $region28
      $region27: #{final_up.1} parent=11 // pred_region
        _
      $region28: #{final_up.1} parent=11 // pred_fallthru
        _
      // Predicated region
      $region29: #{final_up.1} parent=11 // pred_check
        %p196 = pneg %p143
      $region30: #{final_up.1} parent=11 // pred_check_branch
        %198 = sbr.rel (%p196) target = $region32
      $region31: #{final_up.1} parent=11 // pred_region
        _
      $region32: #{final_up.1} parent=11 // pred_fallthru
        _
    $region12: #{final_up.1} parent=5 // pred_fallthru
      _
    %p199 = scmp.lt.s32.totalorder %s12, 4
    // Predicated region
    $region33: #{final_up.1} parent=5 // pred_check
      %p200 = pneg %p199
    $region34: #{final_up.1} parent=5 // pred_check_branch
      %202 = sbr.rel (%p200) target = $region36
    $region35: #{final_up.1} parent=5 // pred_region
      // Predicated region
      $region37: #{final_up.1} parent=35 // pred_check
        %p203 = pneg %p32
      $region38: #{final_up.1} parent=35 // pred_check_branch
        %205 = sbr.rel (%p203) target = $region40
      $region39: #{final_up.1} parent=35 // pred_region
        %s206 = smul.u32 16, %s12
        %p207 = scmp.lt.s32.totalorder %s206, 63
        %s208 = scalar_select %p207, %s206, 63
        %s209 = smul.addr %s208, 4
        %s210 = scalar_lea.vmem %s0, %s209
        %s211 = smul.u32 16, %s12
      $region40: #{final_up.1} parent=35 // pred_fallthru
        _
    $region36: #{final_up.1} parent=5 // pred_fallthru
      _
    %p212 = scmp.le.s32.totalorder 1, %s12
    %p213 = scmp.lt.s32.totalorder %s12, 5
    %p214 = pnand %p212, %p213
    %p215 = pneg %p214
    // Predicated region
    $region41: #{final_up.1} parent=5 // pred_check
      _
    $region42: #{final_up.1} parent=5 // pred_check_branch
      %217 = sbr.rel (%p214) target = $region44
    $region43: #{final_up.1} parent=5 // pred_region
      %s218 = ssub.s32 %s12, 1
      %s219 = smul.u32 16, %s17
      %p220 = scmp.lt.s32.totalorder %s219, 63
      %s221 = scalar_select %p220, %s219, 63
      %s222 = smul.addr %s221, 4
      %s223 = scalar_lea.vmem %s0, %s222
      %p224 = pneg %p38
      %p225 = pneg %p35
      %p226 = pneg %p59
      %p227 = pneg %p56
      %p228 = pneg %p80
      %p229 = pneg %p77
      %p230 = pneg %p101
      %p231 = pneg %p98
      %p232 = pneg %p122
      %p233 = pneg %p119
      %p234 = pneg %p143
      %p235 = pneg %p140
      %p236 = pneg %p169
      %p237 = pneg %p166
      %s238 = smul.u32 16, %s17
      %p239 = scmp.lt.s32.totalorder %s238, 63
      %s240 = scalar_select %p239, %s238, 63
      %s241 = smul.addr %s240, 8
      %s242 = scalar_lea.vmem %s6, %s241
      %s243 = smul.u32 16, %s17
      %p244 = scmp.lt.s32.totalorder %s243, 63
      %s245 = scalar_select %p244, %s243, 63
      %s246 = smul.addr %s245, 4
      %s247 = scalar_lea.vmem %s0, %s246
      %s248 = smul.u32 16, %s17
      %s249 = smul.u32 16, %s17
      %p250 = scmp.lt.s32.totalorder %s249, 63
      %s251 = scalar_select %p250, %s249, 63
      %s252 = smul.addr %s251, 8
      %s253 = scalar_lea.vmem %s6, %s252
      %s254 = smul.u32 16, %s17
      %v256 = vld [vmem:[%s247] sm:$0xf]
      %v257 = vld [vmem:[%s247 + $0x4] sm:$0xf]
      %v258 = vld [vmem:[%s247 + $0x8] sm:$0xf]
      %v259 = vld [vmem:[%s247 + $0xc] sm:$0xf]
      %v260 = vld [vmem:[%s247 + $0x10] sm:$0xf]
      %v261 = vld [vmem:[%s247 + $0x14] sm:$0xf]
      %v262 = vld [vmem:[%s247 + $0x18] sm:$0xf]
      %v263 = vld [vmem:[%s247 + $0x1c] sm:$0xf]
      %v264 = vld [vmem:[%s247 + $0x20] sm:$0xf]
      %v265 = vld [vmem:[%s247 + $0x24] sm:$0xf]
      %v266 = vld [vmem:[%s247 + $0x28] sm:$0xf]
      %v267 = vld [vmem:[%s247 + $0x2c] sm:$0xf]
      %v268 = vld [vmem:[%s247 + $0x30] sm:$0xf]
      %v269 = vld [vmem:[%s247 + $0x34] sm:$0xf]
      %v270 = vld [vmem:[%s247 + $0x38] sm:$0xf]
      %v271 = vld [vmem:[%s247 + $0x3c] sm:$0xf]
      %v272 = vld [vmem:[%s1] sm:$0xf]
      %v273 = vld [vmem:[%s1 + $0x4] sm:$0xf]
      %v274 = vld [vmem:[%s1 + $0x8] sm:$0xf]
      %v275 = vld [vmem:[%s1 + $0xc] sm:$0xf]
      %v292 = vunpack.c.l.b16 %v256
      %v293 = vunpack.c.l.b16 %v257
      %v294 = vunpack.c.l.b16 %v258
      %v295 = vunpack.c.l.b16 %v259
      %v296 = vunpack.c.l.b16 %v260
      %v297 = vunpack.c.l.b16 %v261
      %v298 = vunpack.c.l.b16 %v262
      %v299 = vunpack.c.l.b16 %v263
      %v300 = vunpack.c.l.b16 %v264
      %v301 = vunpack.c.l.b16 %v265
      %v302 = vunpack.c.l.b16 %v266
      %v303 = vunpack.c.l.b16 %v267
      %v304 = vunpack.c.l.b16 %v268
      %v305 = vunpack.c.l.b16 %v269
      %v306 = vunpack.c.l.b16 %v270
      %v307 = vunpack.c.l.b16 %v271
      %v308 = vpack.c.b16 %v293, %v292
      %v309 = vpack.c.b16 %v295, %v294
      %v310 = vpack.c.b16 %v297, %v296
      %v311 = vpack.c.b16 %v299, %v298
      %v312 = vpack.c.b16 %v301, %v300
      %v313 = vpack.c.b16 %v303, %v302
      %v314 = vpack.c.b16 %v305, %v304
      %v315 = vpack.c.b16 %v307, %v306
      %v320 = vunpack.c.l.b16 %v272
      %v321 = vunpack.c.l.b16 %v273
      %v322 = vunpack.c.l.b16 %v274
      %v323 = vunpack.c.l.b16 %v275
      %v324 = vpack.c.b16 %v321, %v320
      %v325 = vpack.c.b16 %v323, %v322
      %vm328 = vcmask 261120
      %v330 = vsel %vm328, %v308, 0
      %v333 = vsel %vm328, %v309, 0
      %v336 = vsel %vm328, %v310, 0
      %v339 = vsel %vm328, %v311, 0
      %v342 = vsel %vm328, %v312, 0
      %v345 = vsel %vm328, %v313, 0
      %v348 = vsel %vm328, %v314, 0
      %v351 = vsel %vm328, %v315, 0
      %353 = vmatprep.subr.bf16.mxu0 0
      %354 = vmatpush1.bf16.msra.mxu0 %v324
      %355 = vmatprep.subr.bf16.mxu0 0
      %356 = vmatpush1.bf16.msra.mxu0 %v325
      %357 = vmatprep.subr.bf16.mxu0 0
      %358 = vmatpush1.bf16.msra.mxu0 0
      %359 = vmatprep.subr.bf16.mxu0 0
      %360 = vmatpush1.bf16.msra.mxu0 0
      %361 = vmatprep.subr.bf16.mxu0 0
      %362 = vmatpush1.bf16.msra.mxu0 0
      %363 = vmatprep.subr.bf16.mxu0 0
      %364 = vmatpush1.bf16.msra.mxu0 0
      %365 = vmatprep.subr.bf16.mxu0 0
      %366 = vmatpush1.bf16.msra.mxu0 0
      %367 = vmatprep.subr.bf16.mxu0 0
      %368 = vmatpush1.bf16.msra.mxu0 0
      %369 = vmatprep.subr.bf16.mxu0 0
      %370 = vmatpush1.bf16.msra.mxu0 0
      %371 = vmatprep.subr.bf16.mxu0 0
      %372 = vmatpush1.bf16.msra.mxu0 0
      %373 = vmatprep.subr.bf16.mxu0 0
      %374 = vmatpush1.bf16.msra.mxu0 0
      %375 = vmatprep.subr.bf16.mxu0 0
      %376 = vmatpush1.bf16.msra.mxu0 0
      %377 = vmatprep.subr.bf16.mxu0 0
      %378 = vmatpush1.bf16.msra.mxu0 0
      %379 = vmatprep.subr.bf16.mxu0 0
      %380 = vmatpush1.bf16.msra.mxu0 0
      %381 = vmatprep.subr.bf16.mxu0 0
      %382 = vmatpush1.bf16.msra.mxu0 0
      %383 = vmatprep.subr.bf16.mxu0 0
      %384 = vmatpush1.bf16.msra.mxu0 0
      %385 = vmatprep.mubr.bf16.mxu0 0
      %386 = vmatmul.mubr.bf16.gmra.mrb[0].mxu0 %v330
      %v387 = vpop.f32.mrb[0].mxu0
      %v388 = vadd.f32 0.0, %v387
      %v389 = vpop.f32.mrb[0].mxu0
      %v390 = vpop.f32.mrb[0].mxu0
      %v391 = vadd.f32 0.0, %v390
      %v392 = vpop.f32.mrb[0].mxu0
      %393 = vmatprep.mubr.bf16.mxu0 0
      %394 = vmatmul.mubr.bf16.gmra.mrb[0].mxu0 %v333
      %v395 = vpop.f32.mrb[0].mxu0
      %v396 = vadd.f32 0.0, %v395
      %v397 = vpop.f32.mrb[0].mxu0
      %v398 = vpop.f32.mrb[0].mxu0
      %v399 = vadd.f32 0.0, %v398
      %v400 = vpop.f32.mrb[0].mxu0
      %401 = vmatprep.mubr.bf16.mxu0 0
      %402 = vmatmul.mubr.bf16.gmra.mrb[0].mxu0 %v336
      %v403 = vpop.f32.mrb[0].mxu0
      %v404 = vadd.f32 0.0, %v403
      %v405 = vpop.f32.mrb[0].mxu0
      %v406 = vpop.f32.mrb[0].mxu0
      %v407 = vadd.f32 0.0, %v406
      %v408 = vpop.f32.mrb[0].mxu0
      %409 = vmatprep.mubr.bf16.mxu0 0
      %410 = vmatmul.mubr.bf16.gmra.mrb[0].mxu0 %v339
      %v411 = vpop.f32.mrb[0].mxu0
      %v412 = vadd.f32 0.0, %v411
      %v413 = vpop.f32.mrb[0].mxu0
      %v414 = vpop.f32.mrb[0].mxu0
      %v415 = vadd.f32 0.0, %v414
      %v416 = vpop.f32.mrb[0].mxu0
      %417 = vmatprep.mubr.bf16.mxu0 0
      %418 = vmatmul.mubr.bf16.gmra.mrb[0].mxu0 %v342
      %v419 = vpop.f32.mrb[0].mxu0
      %v420 = vadd.f32 0.0, %v419
      %v421 = vpop.f32.mrb[0].mxu0
      %v422 = vpop.f32.mrb[0].mxu0
      %v423 = vadd.f32 0.0, %v422
      %v424 = vpop.f32.mrb[0].mxu0
      %425 = vmatprep.mubr.bf16.mxu0 0
      %426 = vmatmul.mubr.bf16.gmra.mrb[0].mxu0 %v345
      %v427 = vpop.f32.mrb[0].mxu0
      %v428 = vadd.f32 0.0, %v427
      %v429 = vpop.f32.mrb[0].mxu0
      %v430 = vpop.f32.mrb[0].mxu0
      %v431 = vadd.f32 0.0, %v430
      %v432 = vpop.f32.mrb[0].mxu0
      %433 = vmatprep.mubr.bf16.mxu0 0
      %434 = vmatmul.mubr.bf16.gmra.mrb[0].mxu0 %v348
      %v435 = vpop.f32.mrb[0].mxu0
      %v436 = vadd.f32 0.0, %v435
      %v437 = vpop.f32.mrb[0].mxu0
      %v438 = vpop.f32.mrb[0].mxu0
      %v439 = vadd.f32 0.0, %v438
      %v440 = vpop.f32.mrb[0].mxu0
      %441 = vmatprep.mubr.bf16.mxu0 0
      %442 = vmatmul.mubr.bf16.gmra.mrb[0].mxu0 %v351
      %v443 = vpop.f32.mrb[0].mxu0
      %v444 = vadd.f32 0.0, %v443
      %v445 = vpop.f32.mrb[0].mxu0
      %v446 = vpop.f32.mrb[0].mxu0
      %v447 = vadd.f32 0.0, %v446
      %v448 = vpop.f32.mrb[0].mxu0
      %449 = vdwg.mxu0
      %v450 = vld [vmem:[%s4] sm:$0xff]
      %v451 = vld [vmem:[%s4 + $0x8] sm:$0xff]
      %v452 = vld [vmem:[%s4 + $0x10] sm:$0xff]
      %v453 = vld [vmem:[%s4 + $0x18] sm:$0xff]
      %v454 = vld [vmem:[%s4 + $0x20] sm:$0xff]
      %v455 = vld [vmem:[%s4 + $0x28] sm:$0xff]
      %v456 = vld [vmem:[%s4 + $0x30] sm:$0xff]
      %v457 = vld [vmem:[%s4 + $0x38] sm:$0xff]
      %v458 = vld [vmem:[%s4 + $0x40] sm:$0xff]
      %v459 = vld [vmem:[%s4 + $0x48] sm:$0xff]
      %v460 = vld [vmem:[%s4 + $0x50] sm:$0xff]
      %v461 = vld [vmem:[%s4 + $0x58] sm:$0xff]
      %v462 = vld [vmem:[%s4 + $0x60] sm:$0xff]
      %v463 = vld [vmem:[%s4 + $0x68] sm:$0xff]
      %v464 = vld [vmem:[%s4 + $0x70] sm:$0xff]
      %v465 = vld [vmem:[%s4 + $0x78] sm:$0xff]
      %v466 = vld [vmem:[%s5] sm:$0xf]
      %467 = vmatprep.subr.mxu0 0.0
      %468 = vmatpush1.msra.mxu0 %v450
      %469 = vmatprep.subr.mxu0 0.0
      %470 = vmatpush1.msra.mxu0 %v451
      %471 = vmatprep.subr.mxu0 0.0
      %472 = vmatpush1.msra.mxu0 %v452
      %473 = vmatprep.subr.mxu0 0.0
      %474 = vmatpush1.msra.mxu0 %v453
      %475 = vmatprep.subr.mxu0 0.0
      %476 = vmatpush1.msra.mxu0 %v454
      %477 = vmatprep.subr.mxu0 0.0
      %478 = vmatpush1.msra.mxu0 %v455
      %479 = vmatprep.subr.mxu0 0.0
      %480 = vmatpush1.msra.mxu0 %v456
      %481 = vmatprep.subr.mxu0 0.0
      %482 = vmatpush1.msra.mxu0 %v457
      %483 = vmatprep.subr.mxu0 0.0
      %484 = vmatpush1.msra.mxu0 %v458
      %485 = vmatprep.subr.mxu0 0.0
      %486 = vmatpush1.msra.mxu0 %v459
      %487 = vmatprep.subr.mxu0 0.0
      %488 = vmatpush1.msra.mxu0 %v460
      %489 = vmatprep.subr.mxu0 0.0
      %490 = vmatpush1.msra.mxu0 %v461
      %491 = vmatprep.subr.mxu0 0.0
      %492 = vmatpush1.msra.mxu0 %v462
      %493 = vmatprep.subr.mxu0 0.0
      %494 = vmatpush1.msra.mxu0 %v463
      %495 = vmatprep.subr.mxu0 0.0
      %496 = vmatpush1.msra.mxu0 %v464
      %497 = vmatprep.subr.mxu0 0.0
      %498 = vmatpush1.msra.mxu0 %v465
      %499 = vmatprep.subr.mxu0 0.0
      %500 = vmatpush1.msra.mxu0 0.0
      %501 = vmatprep.subr.mxu0 0.0
      %502 = vmatpush1.msra.mxu0 0.0
      %503 = vmatprep.subr.mxu0 0.0
      %504 = vmatpush1.msra.mxu0 0.0
      %505 = vmatprep.subr.mxu0 0.0
      %506 = vmatpush1.msra.mxu0 0.0
      %507 = vmatprep.subr.mxu0 0.0
      %508 = vmatpush1.msra.mxu0 0.0
      %509 = vmatprep.subr.mxu0 0.0
      %510 = vmatpush1.msra.mxu0 0.0
      %511 = vmatprep.subr.mxu0 0.0
      %512 = vmatpush1.msra.mxu0 0.0
      %513 = vmatprep.subr.mxu0 0.0
      %514 = vmatpush1.msra.mxu0 0.0
      %515 = vmatprep.subr.mxu0 0.0
      %516 = vmatpush1.msra.mxu0 0.0
      %517 = vmatprep.subr.mxu0 0.0
      %518 = vmatpush1.msra.mxu0 0.0
      %519 = vmatprep.subr.mxu0 0.0
      %520 = vmatpush1.msra.mxu0 0.0
      %521 = vmatprep.subr.mxu0 0.0
      %522 = vmatpush1.msra.mxu0 0.0
      %523 = vmatprep.subr.mxu0 0.0
      %524 = vmatpush1.msra.mxu0 0.0
      %525 = vmatprep.subr.mxu0 0.0
      %526 = vmatpush1.msra.mxu0 0.0
      %527 = vmatprep.subr.mxu0 0.0
      %528 = vmatpush1.msra.mxu0 0.0
      %529 = vmatprep.subr.mxu0 0.0
      %530 = vmatpush1.msra.mxu0 0.0
      %531 = vmatprep.mubr.f32.mxu0 0.0
      %532 = vmatmul.mubr.f32.gmra.mrb[0].mxu0 %v388
      %v533 = vpop.f32.mrb[0].mxu0
      %v534 = vadd.f32 0.0, %v533
      %v535 = vpop.f32.mrb[0].mxu0
      %536 = vmatprep.mubr.f32.mxu0 0.0
      %537 = vmatmul.mubr.f32.gmra.mrb[0].mxu0 %v391
      %v538 = vpop.f32.mrb[0].mxu0
      %v539 = vadd.f32 0.0, %v538
      %v540 = vpop.f32.mrb[0].mxu0
      %541 = vmatprep.mubr.f32.mxu0 0.0
      %542 = vmatmul.mubr.f32.gmra.mrb[0].mxu0 %v396
      %v543 = vpop.f32.mrb[0].mxu0
      %v544 = vadd.f32 0.0, %v543
      %v545 = vpop.f32.mrb[0].mxu0
      %546 = vmatprep.mubr.f32.mxu0 0.0
      %547 = vmatmul.mubr.f32.gmra.mrb[0].mxu0 %v399
      %v548 = vpop.f32.mrb[0].mxu0
      %v549 = vadd.f32 0.0, %v548
      %v550 = vpop.f32.mrb[0].mxu0
      %551 = vmatprep.mubr.f32.mxu0 0.0
      %552 = vmatmul.mubr.f32.gmra.mrb[0].mxu0 %v404
      %v553 = vpop.f32.mrb[0].mxu0
      %v554 = vadd.f32 0.0, %v553
      %v555 = vpop.f32.mrb[0].mxu0
      %556 = vmatprep.mubr.f32.mxu0 0.0
      %557 = vmatmul.mubr.f32.gmra.mrb[0].mxu0 %v407
      %v558 = vpop.f32.mrb[0].mxu0
      %v559 = vadd.f32 0.0, %v558
      %v560 = vpop.f32.mrb[0].mxu0
      %561 = vmatprep.mubr.f32.mxu0 0.0
      %562 = vmatmul.mubr.f32.gmra.mrb[0].mxu0 %v412
      %v563 = vpop.f32.mrb[0].mxu0
      %v564 = vadd.f32 0.0, %v563
      %v565 = vpop.f32.mrb[0].mxu0
      %566 = vmatprep.mubr.f32.mxu0 0.0
      %567 = vmatmul.mubr.f32.gmra.mrb[0].mxu0 %v415
      %v568 = vpop.f32.mrb[0].mxu0
      %v569 = vadd.f32 0.0, %v568
      %v570 = vpop.f32.mrb[0].mxu0
      %571 = vmatprep.mubr.f32.mxu0 0.0
      %572 = vmatmul.mubr.f32.gmra.mrb[0].mxu0 %v420
      %v573 = vpop.f32.mrb[0].mxu0
      %v574 = vadd.f32 0.0, %v573
      %v575 = vpop.f32.mrb[0].mxu0
      %576 = vmatprep.mubr.f32.mxu0 0.0
      %577 = vmatmul.mubr.f32.gmra.mrb[0].mxu0 %v423
      %v578 = vpop.f32.mrb[0].mxu0
      %v579 = vadd.f32 0.0, %v578
      %v580 = vpop.f32.mrb[0].mxu0
      %581 = vmatprep.mubr.f32.mxu0 0.0
      %582 = vmatmul.mubr.f32.gmra.mrb[0].mxu0 %v428
      %v583 = vpop.f32.mrb[0].mxu0
      %v584 = vadd.f32 0.0, %v583
      %v585 = vpop.f32.mrb[0].mxu0
      %586 = vmatprep.mubr.f32.mxu0 0.0
      %587 = vmatmul.mubr.f32.gmra.mrb[0].mxu0 %v431
      %v588 = vpop.f32.mrb[0].mxu0
      %v589 = vadd.f32 0.0, %v588
      %v590 = vpop.f32.mrb[0].mxu0
      %591 = vmatprep.mubr.f32.mxu0 0.0
      %592 = vmatmul.mubr.f32.gmra.mrb[0].mxu0 %v436
      %v593 = vpop.f32.mrb[0].mxu0
      %v594 = vadd.f32 0.0, %v593
      %v595 = vpop.f32.mrb[0].mxu0
      %596 = vmatprep.mubr.f32.mxu0 0.0
      %597 = vmatmul.mubr.f32.gmra.mrb[0].mxu0 %v439
      %v598 = vpop.f32.mrb[0].mxu0
      %v599 = vadd.f32 0.0, %v598
      %v600 = vpop.f32.mrb[0].mxu0
      %601 = vmatprep.mubr.f32.mxu0 0.0
      %602 = vmatmul.mubr.f32.gmra.mrb[0].mxu0 %v444
      %v603 = vpop.f32.mrb[0].mxu0
      %v604 = vadd.f32 0.0, %v603
      %v605 = vpop.f32.mrb[0].mxu0
      %606 = vmatprep.mubr.f32.mxu0 0.0
      %607 = vmatmul.mubr.f32.gmra.mrb[0].mxu0 %v447
      %v608 = vpop.f32.mrb[0].mxu0
      %v609 = vadd.f32 0.0, %v608
      %v610 = vpop.f32.mrb[0].mxu0
      %611 = vdwg.mxu0
      %vm612 = vcmask 31744
      %v614 = vsel %vm612, %v534, 0
      %v617 = vsel %vm612, %v539, 0
      %v620 = vsel %vm612, %v544, 0
      %v623 = vsel %vm612, %v549, 0
      %v626 = vsel %vm612, %v554, 0
      %v629 = vsel %vm612, %v559, 0
      %v632 = vsel %vm612, %v564, 0
      %v635 = vsel %vm612, %v569, 0
      %v638 = vsel %vm612, %v574, 0
      %v641 = vsel %vm612, %v579, 0
      %v644 = vsel %vm612, %v584, 0
      %v647 = vsel %vm612, %v589, 0
      %v650 = vsel %vm612, %v594, 0
      %v653 = vsel %vm612, %v599, 0
      %v656 = vsel %vm612, %v604, 0
      %v659 = vsel %vm612, %v609, 0
      %vm661 = vcmask 1043456
      %v663 = vsel %vm661, %v466, 0
      %665 = vmatprep.subr.mxu0 0.0
      %666 = vmatpush1.msra.mxu0 %v663
      %667 = vmatprep.subr.mxu0 0.0
      %668 = vmatpush1.msra.mxu0 0.0
      %669 = vmatprep.subr.mxu0 0.0
      %670 = vmatpush1.msra.mxu0 0.0
      %671 = vmatprep.subr.mxu0 0.0
      %672 = vmatpush1.msra.mxu0 0.0
      %673 = vmatprep.subr.mxu0 0.0
      %674 = vmatpush1.msra.mxu0 0.0
      %675 = vmatprep.subr.mxu0 0.0
      %676 = vmatpush1.msra.mxu0 0.0
      %677 = vmatprep.subr.mxu0 0.0
      %678 = vmatpush1.msra.mxu0 0.0
      %679 = vmatprep.subr.mxu0 0.0
      %680 = vmatpush1.msra.mxu0 0.0
      %681 = vmatprep.subr.mxu0 0.0
      %682 = vmatpush1.msra.mxu0 0.0
      %683 = vmatprep.subr.mxu0 0.0
      %684 = vmatpush1.msra.mxu0 0.0
      %685 = vmatprep.subr.mxu0 0.0
      %686 = vmatpush1.msra.mxu0 0.0
      %687 = vmatprep.subr.mxu0 0.0
      %688 = vmatpush1.msra.mxu0 0.0
      %689 = vmatprep.subr.mxu0 0.0
      %690 = vmatpush1.msra.mxu0 0.0
      %691 = vmatprep.subr.mxu0 0.0
      %692 = vmatpush1.msra.mxu0 0.0
      %693 = vmatprep.subr.mxu0 0.0
      %694 = vmatpush1.msra.mxu0 0.0
      %695 = vmatprep.subr.mxu0 0.0
      %696 = vmatpush1.msra.mxu0 0.0
      %697 = vmatprep.subr.mxu0 0.0
      %698 = vmatpush1.msra.mxu0 0.0
      %699 = vmatprep.subr.mxu0 0.0
      %700 = vmatpush1.msra.mxu0 0.0
      %701 = vmatprep.subr.mxu0 0.0
      %702 = vmatpush1.msra.mxu0 0.0
      %703 = vmatprep.subr.mxu0 0.0
      %704 = vmatpush1.msra.mxu0 0.0
      %705 = vmatprep.subr.mxu0 0.0
      %706 = vmatpush1.msra.mxu0 0.0
      %707 = vmatprep.subr.mxu0 0.0
      %708 = vmatpush1.msra.mxu0 0.0
      %709 = vmatprep.subr.mxu0 0.0
      %710 = vmatpush1.msra.mxu0 0.0
      %711 = vmatprep.subr.mxu0 0.0
      %712 = vmatpush1.msra.mxu0 0.0
      %713 = vmatprep.subr.mxu0 0.0
      %714 = vmatpush1.msra.mxu0 0.0
      %715 = vmatprep.subr.mxu0 0.0
      %716 = vmatpush1.msra.mxu0 0.0
      %717 = vmatprep.subr.mxu0 0.0
      %718 = vmatpush1.msra.mxu0 0.0
      %719 = vmatprep.subr.mxu0 0.0
      %720 = vmatpush1.msra.mxu0 0.0
      %721 = vmatprep.subr.mxu0 0.0
      %722 = vmatpush1.msra.mxu0 0.0
      %723 = vmatprep.subr.mxu0 0.0
      %724 = vmatpush1.msra.mxu0 0.0
      %725 = vmatprep.subr.mxu0 0.0
      %726 = vmatpush1.msra.mxu0 0.0
      %727 = vmatprep.subr.mxu0 0.0
      %728 = vmatpush1.msra.mxu0 0.0
      %729 = vmatprep.mubr.f32.mxu0 0.0
      %730 = vmatmul.mubr.f32.gmra.mrb[0].mxu0 %v614
      %v731 = vpop.f32.mrb[0].mxu0
      %v732 = vadd.f32 0.0, %v731
      %v733 = vpop.f32.mrb[0].mxu0
      %734 = vmatprep.mubr.f32.mxu0 0.0
      %735 = vmatmul.mubr.f32.gmra.mrb[0].mxu0 %v617
      %v736 = vpop.f32.mrb[0].mxu0
      %v737 = vadd.f32 0.0, %v736
      %v738 = vpop.f32.mrb[0].mxu0
      %739 = vmatprep.mubr.f32.mxu0 0.0
      %740 = vmatmul.mubr.f32.gmra.mrb[0].mxu0 %v620
      %v741 = vpop.f32.mrb[0].mxu0
      %v742 = vadd.f32 0.0, %v741
      %v743 = vpop.f32.mrb[0].mxu0
      %744 = vmatprep.mubr.f32.mxu0 0.0
      %745 = vmatmul.mubr.f32.gmra.mrb[0].mxu0 %v623
      %v746 = vpop.f32.mrb[0].mxu0
      %v747 = vadd.f32 0.0, %v746
      %v748 = vpop.f32.mrb[0].mxu0
      %749 = vmatprep.mubr.f32.mxu0 0.0
      %750 = vmatmul.mubr.f32.gmra.mrb[0].mxu0 %v626
      %v751 = vpop.f32.mrb[0].mxu0
      %v752 = vadd.f32 0.0, %v751
      %v753 = vpop.f32.mrb[0].mxu0
      %754 = vmatprep.mubr.f32.mxu0 0.0
      %755 = vmatmul.mubr.f32.gmra.mrb[0].mxu0 %v629
      %v756 = vpop.f32.mrb[0].mxu0
      %v757 = vadd.f32 0.0, %v756
      %v758 = vpop.f32.mrb[0].mxu0
      %759 = vmatprep.mubr.f32.mxu0 0.0
      %760 = vmatmul.mubr.f32.gmra.mrb[0].mxu0 %v632
      %v761 = vpop.f32.mrb[0].mxu0
      %v762 = vadd.f32 0.0, %v761
      %v763 = vpop.f32.mrb[0].mxu0
      %764 = vmatprep.mubr.f32.mxu0 0.0
      %765 = vmatmul.mubr.f32.gmra.mrb[0].mxu0 %v635
      %v766 = vpop.f32.mrb[0].mxu0
      %v767 = vadd.f32 0.0, %v766
      %v768 = vpop.f32.mrb[0].mxu0
      %769 = vmatprep.mubr.f32.mxu0 0.0
      %770 = vmatmul.mubr.f32.gmra.mrb[0].mxu0 %v638
      %v771 = vpop.f32.mrb[0].mxu0
      %v772 = vadd.f32 0.0, %v771
      %v773 = vpop.f32.mrb[0].mxu0
      %774 = vmatprep.mubr.f32.mxu0 0.0
      %775 = vmatmul.mubr.f32.gmra.mrb[0].mxu0 %v641
      %v776 = vpop.f32.mrb[0].mxu0
      %v777 = vadd.f32 0.0, %v776
      %v778 = vpop.f32.mrb[0].mxu0
      %779 = vmatprep.mubr.f32.mxu0 0.0
      %780 = vmatmul.mubr.f32.gmra.mrb[0].mxu0 %v644
      %v781 = vpop.f32.mrb[0].mxu0
      %v782 = vadd.f32 0.0, %v781
      %v783 = vpop.f32.mrb[0].mxu0
      %784 = vmatprep.mubr.f32.mxu0 0.0
      %785 = vmatmul.mubr.f32.gmra.mrb[0].mxu0 %v647
      %v786 = vpop.f32.mrb[0].mxu0
      %v787 = vadd.f32 0.0, %v786
      %v788 = vpop.f32.mrb[0].mxu0
      %789 = vmatprep.mubr.f32.mxu0 0.0
      %790 = vmatmul.mubr.f32.gmra.mrb[0].mxu0 %v650
      %v791 = vpop.f32.mrb[0].mxu0
      %v792 = vadd.f32 0.0, %v791
      %v793 = vpop.f32.mrb[0].mxu0
      %794 = vmatprep.mubr.f32.mxu0 0.0
      %795 = vmatmul.mubr.f32.gmra.mrb[0].mxu0 %v653
      %v796 = vpop.f32.mrb[0].mxu0
      %v797 = vadd.f32 0.0, %v796
      %v798 = vpop.f32.mrb[0].mxu0
      %799 = vmatprep.mubr.f32.mxu0 0.0
      %800 = vmatmul.mubr.f32.gmra.mrb[0].mxu0 %v656
      %v801 = vpop.f32.mrb[0].mxu0
      %v802 = vadd.f32 0.0, %v801
      %v803 = vpop.f32.mrb[0].mxu0
      %804 = vmatprep.mubr.f32.mxu0 0.0
      %805 = vmatmul.mubr.f32.gmra.mrb[0].mxu0 %v659
      %v806 = vpop.f32.mrb[0].mxu0
      %v807 = vadd.f32 0.0, %v806
      %v808 = vpop.f32.mrb[0].mxu0
      %809 = vdwg.mxu0
      %v810 = vsub.f32 %v388, %v732
      %v811 = vsub.f32 %v391, %v737
      %v812 = vsub.f32 %v396, %v742
      %v813 = vsub.f32 %v399, %v747
      %v814 = vsub.f32 %v404, %v752
      %v815 = vsub.f32 %v407, %v757
      %v816 = vsub.f32 %v412, %v762
      %v817 = vsub.f32 %v415, %v767
      %v818 = vsub.f32 %v420, %v772
      %v819 = vsub.f32 %v423, %v777
      %v820 = vsub.f32 %v428, %v782
      %v821 = vsub.f32 %v431, %v787
      %v822 = vsub.f32 %v436, %v792
      %v823 = vsub.f32 %v439, %v797
      %v824 = vsub.f32 %v444, %v802
      %v825 = vsub.f32 %v447, %v807
      %v826 = vmul.f32 %v810, %v810
      %v827 = vmul.f32 %v811, %v811
      %v828 = vmul.f32 %v812, %v812
      %v829 = vmul.f32 %v813, %v813
      %v830 = vmul.f32 %v814, %v814
      %v831 = vmul.f32 %v815, %v815
      %v832 = vmul.f32 %v816, %v816
      %v833 = vmul.f32 %v817, %v817
      %v834 = vmul.f32 %v818, %v818
      %v835 = vmul.f32 %v819, %v819
      %v836 = vmul.f32 %v820, %v820
      %v837 = vmul.f32 %v821, %v821
      %v838 = vmul.f32 %v822, %v822
      %v839 = vmul.f32 %v823, %v823
      %v840 = vmul.f32 %v824, %v824
      %v841 = vmul.f32 %v825, %v825
      %842 = vmatprep.subr.mxu0 0.0
      %843 = vmatpush1.msra.mxu0 %v450
      %844 = vmatprep.subr.mxu0 0.0
      %845 = vmatpush1.msra.mxu0 %v451
      %846 = vmatprep.subr.mxu0 0.0
      %847 = vmatpush1.msra.mxu0 %v452
      %848 = vmatprep.subr.mxu0 0.0
      %849 = vmatpush1.msra.mxu0 %v453
      %850 = vmatprep.subr.mxu0 0.0
      %851 = vmatpush1.msra.mxu0 %v454
      %852 = vmatprep.subr.mxu0 0.0
      %853 = vmatpush1.msra.mxu0 %v455
      %854 = vmatprep.subr.mxu0 0.0
      %855 = vmatpush1.msra.mxu0 %v456
      %856 = vmatprep.subr.mxu0 0.0
      %857 = vmatpush1.msra.mxu0 %v457
      %858 = vmatprep.subr.mxu0 0.0
      %859 = vmatpush1.msra.mxu0 %v458
      %860 = vmatprep.subr.mxu0 0.0
      %861 = vmatpush1.msra.mxu0 %v459
      %862 = vmatprep.subr.mxu0 0.0
      %863 = vmatpush1.msra.mxu0 %v460
      %864 = vmatprep.subr.mxu0 0.0
      %865 = vmatpush1.msra.mxu0 %v461
      %866 = vmatprep.subr.mxu0 0.0
      %867 = vmatpush1.msra.mxu0 %v462
      %868 = vmatprep.subr.mxu0 0.0
      %869 = vmatpush1.msra.mxu0 %v463
      %870 = vmatprep.subr.mxu0 0.0
      %871 = vmatpush1.msra.mxu0 %v464
      %872 = vmatprep.subr.mxu0 0.0
      %873 = vmatpush1.msra.mxu0 %v465
      %874 = vmatprep.subr.mxu0 0.0
      %875 = vmatpush1.msra.mxu0 0.0
      %876 = vmatprep.subr.mxu0 0.0
      %877 = vmatpush1.msra.mxu0 0.0
      %878 = vmatprep.subr.mxu0 0.0
      %879 = vmatpush1.msra.mxu0 0.0
      %880 = vmatprep.subr.mxu0 0.0
      %881 = vmatpush1.msra.mxu0 0.0
      %882 = vmatprep.subr.mxu0 0.0
      %883 = vmatpush1.msra.mxu0 0.0
      %884 = vmatprep.subr.mxu0 0.0
      %885 = vmatpush1.msra.mxu0 0.0
      %886 = vmatprep.subr.mxu0 0.0
      %887 = vmatpush1.msra.mxu0 0.0
      %888 = vmatprep.subr.mxu0 0.0
      %889 = vmatpush1.msra.mxu0 0.0
      %890 = vmatprep.subr.mxu0 0.0
      %891 = vmatpush1.msra.mxu0 0.0
      %892 = vmatprep.subr.mxu0 0.0
      %893 = vmatpush1.msra.mxu0 0.0
      %894 = vmatprep.subr.mxu0 0.0
      %895 = vmatpush1.msra.mxu0 0.0
      %896 = vmatprep.subr.mxu0 0.0
      %897 = vmatpush1.msra.mxu0 0.0
      %898 = vmatprep.subr.mxu0 0.0
      %899 = vmatpush1.msra.mxu0 0.0
      %900 = vmatprep.subr.mxu0 0.0
      %901 = vmatpush1.msra.mxu0 0.0
      %902 = vmatprep.subr.mxu0 0.0
      %903 = vmatpush1.msra.mxu0 0.0
      %904 = vmatprep.subr.mxu0 0.0
      %905 = vmatpush1.msra.mxu0 0.0
      %906 = vmatprep.mubr.f32.mxu0 0.0
      %907 = vmatmul.mubr.f32.gmra.mrb[0].mxu0 %v826
      %v908 = vpop.f32.mrb[0].mxu0
      %v909 = vadd.f32 0.0, %v908
      %v910 = vpop.f32.mrb[0].mxu0
      %911 = vmatprep.mubr.f32.mxu0 0.0
      %912 = vmatmul.mubr.f32.gmra.mrb[0].mxu0 %v827
      %v913 = vpop.f32.mrb[0].mxu0
      %v914 = vadd.f32 0.0, %v913
      %v915 = vpop.f32.mrb[0].mxu0
      %916 = vmatprep.mubr.f32.mxu0 0.0
      %917 = vmatmul.mubr.f32.gmra.mrb[0].mxu0 %v828
      %v918 = vpop.f32.mrb[0].mxu0
      %v919 = vadd.f32 0.0, %v918
      %v920 = vpop.f32.mrb[0].mxu0
      %921 = vmatprep.mubr.f32.mxu0 0.0
      %922 = vmatmul.mubr.f32.gmra.mrb[0].mxu0 %v829
      %v923 = vpop.f32.mrb[0].mxu0
      %v924 = vadd.f32 0.0, %v923
      %v925 = vpop.f32.mrb[0].mxu0
      %926 = vmatprep.mubr.f32.mxu0 0.0
      %927 = vmatmul.mubr.f32.gmra.mrb[0].mxu0 %v830
      %v928 = vpop.f32.mrb[0].mxu0
      %v929 = vadd.f32 0.0, %v928
      %v930 = vpop.f32.mrb[0].mxu0
      %931 = vmatprep.mubr.f32.mxu0 0.0
      %932 = vmatmul.mubr.f32.gmra.mrb[0].mxu0 %v831
      %v933 = vpop.f32.mrb[0].mxu0
      %v934 = vadd.f32 0.0, %v933
      %v935 = vpop.f32.mrb[0].mxu0
      %936 = vmatprep.mubr.f32.mxu0 0.0
      %937 = vmatmul.mubr.f32.gmra.mrb[0].mxu0 %v832
      %v938 = vpop.f32.mrb[0].mxu0
      %v939 = vadd.f32 0.0, %v938
      %v940 = vpop.f32.mrb[0].mxu0
      %941 = vmatprep.mubr.f32.mxu0 0.0
      %942 = vmatmul.mubr.f32.gmra.mrb[0].mxu0 %v833
      %v943 = vpop.f32.mrb[0].mxu0
      %v944 = vadd.f32 0.0, %v943
      %v945 = vpop.f32.mrb[0].mxu0
      %946 = vmatprep.mubr.f32.mxu0 0.0
      %947 = vmatmul.mubr.f32.gmra.mrb[0].mxu0 %v834
      %v948 = vpop.f32.mrb[0].mxu0
      %v949 = vadd.f32 0.0, %v948
      %v950 = vpop.f32.mrb[0].mxu0
      %951 = vmatprep.mubr.f32.mxu0 0.0
      %952 = vmatmul.mubr.f32.gmra.mrb[0].mxu0 %v835
      %v953 = vpop.f32.mrb[0].mxu0
      %v954 = vadd.f32 0.0, %v953
      %v955 = vpop.f32.mrb[0].mxu0
      %956 = vmatprep.mubr.f32.mxu0 0.0
      %957 = vmatmul.mubr.f32.gmra.mrb[0].mxu0 %v836
      %v958 = vpop.f32.mrb[0].mxu0
      %v959 = vadd.f32 0.0, %v958
      %v960 = vpop.f32.mrb[0].mxu0
      %961 = vmatprep.mubr.f32.mxu0 0.0
      %962 = vmatmul.mubr.f32.gmra.mrb[0].mxu0 %v837
      %v963 = vpop.f32.mrb[0].mxu0
      %v964 = vadd.f32 0.0, %v963
      %v965 = vpop.f32.mrb[0].mxu0
      %966 = vmatprep.mubr.f32.mxu0 0.0
      %967 = vmatmul.mubr.f32.gmra.mrb[0].mxu0 %v838
      %v968 = vpop.f32.mrb[0].mxu0
      %v969 = vadd.f32 0.0, %v968
      %v970 = vpop.f32.mrb[0].mxu0
      %971 = vmatprep.mubr.f32.mxu0 0.0
      %972 = vmatmul.mubr.f32.gmra.mrb[0].mxu0 %v839
      %v973 = vpop.f32.mrb[0].mxu0
      %v974 = vadd.f32 0.0, %v973
      %v975 = vpop.f32.mrb[0].mxu0
      %976 = vmatprep.mubr.f32.mxu0 0.0
      %977 = vmatmul.mubr.f32.gmra.mrb[0].mxu0 %v840
      %v978 = vpop.f32.mrb[0].mxu0
      %v979 = vadd.f32 0.0, %v978
      %v980 = vpop.f32.mrb[0].mxu0
      %981 = vmatprep.mubr.f32.mxu0 0.0
      %982 = vmatmul.mubr.f32.gmra.mrb[0].mxu0 %v841
      %v983 = vpop.f32.mrb[0].mxu0
      %v984 = vadd.f32 0.0, %v983
      %v985 = vpop.f32.mrb[0].mxu0
      %986 = vdwg.mxu0
      %v988 = vsel %vm612, %v909, 0
      %v991 = vsel %vm612, %v914, 0
      %v994 = vsel %vm612, %v919, 0
      %v997 = vsel %vm612, %v924, 0
      %v1000 = vsel %vm612, %v929, 0
      %v1003 = vsel %vm612, %v934, 0
      %v1006 = vsel %vm612, %v939, 0
      %v1009 = vsel %vm612, %v944, 0
      %v1012 = vsel %vm612, %v949, 0
      %v1015 = vsel %vm612, %v954, 0
      %v1018 = vsel %vm612, %v959, 0
      %v1021 = vsel %vm612, %v964, 0
      %v1024 = vsel %vm612, %v969, 0
      %v1027 = vsel %vm612, %v974, 0
      %v1030 = vsel %vm612, %v979, 0
      %v1033 = vsel %vm612, %v984, 0
      %1035 = vmatprep.subr.mxu0 0.0
      %1036 = vmatpush1.msra.mxu0 %v663
      %1037 = vmatprep.subr.mxu0 0.0
      %1038 = vmatpush1.msra.mxu0 0.0
      %1039 = vmatprep.subr.mxu0 0.0
      %1040 = vmatpush1.msra.mxu0 0.0
      %1041 = vmatprep.subr.mxu0 0.0
      %1042 = vmatpush1.msra.mxu0 0.0
      %1043 = vmatprep.subr.mxu0 0.0
      %1044 = vmatpush1.msra.mxu0 0.0
      %1045 = vmatprep.subr.mxu0 0.0
      %1046 = vmatpush1.msra.mxu0 0.0
      %1047 = vmatprep.subr.mxu0 0.0
      %1048 = vmatpush1.msra.mxu0 0.0
      %1049 = vmatprep.subr.mxu0 0.0
      %1050 = vmatpush1.msra.mxu0 0.0
      %1051 = vmatprep.subr.mxu0 0.0
      %1052 = vmatpush1.msra.mxu0 0.0
      %1053 = vmatprep.subr.mxu0 0.0
      %1054 = vmatpush1.msra.mxu0 0.0
      %1055 = vmatprep.subr.mxu0 0.0
      %1056 = vmatpush1.msra.mxu0 0.0
      %1057 = vmatprep.subr.mxu0 0.0
      %1058 = vmatpush1.msra.mxu0 0.0
      %1059 = vmatprep.subr.mxu0 0.0
      %1060 = vmatpush1.msra.mxu0 0.0
      %1061 = vmatprep.subr.mxu0 0.0
      %1062 = vmatpush1.msra.mxu0 0.0
      %1063 = vmatprep.subr.mxu0 0.0
      %1064 = vmatpush1.msra.mxu0 0.0
      %1065 = vmatprep.subr.mxu0 0.0
      %1066 = vmatpush1.msra.mxu0 0.0
      %1067 = vmatprep.subr.mxu0 0.0
      %1068 = vmatpush1.msra.mxu0 0.0
      %1069 = vmatprep.subr.mxu0 0.0
      %1070 = vmatpush1.msra.mxu0 0.0
      %1071 = vmatprep.subr.mxu0 0.0
      %1072 = vmatpush1.msra.mxu0 0.0
      %1073 = vmatprep.subr.mxu0 0.0
      %1074 = vmatpush1.msra.mxu0 0.0
      %1075 = vmatprep.subr.mxu0 0.0
      %1076 = vmatpush1.msra.mxu0 0.0
      %1077 = vmatprep.subr.mxu0 0.0
      %1078 = vmatpush1.msra.mxu0 0.0
      %1079 = vmatprep.subr.mxu0 0.0
      %1080 = vmatpush1.msra.mxu0 0.0
      %1081 = vmatprep.subr.mxu0 0.0
      %1082 = vmatpush1.msra.mxu0 0.0
      %1083 = vmatprep.subr.mxu0 0.0
      %1084 = vmatpush1.msra.mxu0 0.0
      %1085 = vmatprep.subr.mxu0 0.0
      %1086 = vmatpush1.msra.mxu0 0.0
      %1087 = vmatprep.subr.mxu0 0.0
      %1088 = vmatpush1.msra.mxu0 0.0
      %1089 = vmatprep.subr.mxu0 0.0
      %1090 = vmatpush1.msra.mxu0 0.0
      %1091 = vmatprep.subr.mxu0 0.0
      %1092 = vmatpush1.msra.mxu0 0.0
      %1093 = vmatprep.subr.mxu0 0.0
      %1094 = vmatpush1.msra.mxu0 0.0
      %1095 = vmatprep.subr.mxu0 0.0
      %1096 = vmatpush1.msra.mxu0 0.0
      %1097 = vmatprep.subr.mxu0 0.0
      %1098 = vmatpush1.msra.mxu0 0.0
      %1099 = vmatprep.mubr.f32.mxu0 0.0
      %1100 = vmatmul.mubr.f32.gmra.mrb[0].mxu0 %v988
      %v1101 = vpop.f32.mrb[0].mxu0
      %v1102 = vadd.f32 1e-05, %v1101
      %v1103 = vpop.f32.mrb[0].mxu0
      %1104 = vmatprep.mubr.f32.mxu0 0.0
      %1105 = vmatmul.mubr.f32.gmra.mrb[0].mxu0 %v991
      %v1106 = vpop.f32.mrb[0].mxu0
      %v1107 = vadd.f32 1e-05, %v1106
      %v1108 = vpop.f32.mrb[0].mxu0
      %1109 = vmatprep.mubr.f32.mxu0 0.0
      %1110 = vmatmul.mubr.f32.gmra.mrb[0].mxu0 %v994
      %v1111 = vpop.f32.mrb[0].mxu0
      %v1112 = vadd.f32 1e-05, %v1111
      %v1113 = vpop.f32.mrb[0].mxu0
      %1114 = vmatprep.mubr.f32.mxu0 0.0
      %1115 = vmatmul.mubr.f32.gmra.mrb[0].mxu0 %v997
      %v1116 = vpop.f32.mrb[0].mxu0
      %v1117 = vadd.f32 1e-05, %v1116
      %v1118 = vpop.f32.mrb[0].mxu0
      %1119 = vmatprep.mubr.f32.mxu0 0.0
      %1120 = vmatmul.mubr.f32.gmra.mrb[0].mxu0 %v1000
      %v1121 = vpop.f32.mrb[0].mxu0
      %v1122 = vadd.f32 1e-05, %v1121
      %v1123 = vpop.f32.mrb[0].mxu0
      %1124 = vmatprep.mubr.f32.mxu0 0.0
      %1125 = vmatmul.mubr.f32.gmra.mrb[0].mxu0 %v1003
      %v1126 = vpop.f32.mrb[0].mxu0
      %v1127 = vadd.f32 1e-05, %v1126
      %v1128 = vpop.f32.mrb[0].mxu0
      %1129 = vmatprep.mubr.f32.mxu0 0.0
      %1130 = vmatmul.mubr.f32.gmra.mrb[0].mxu0 %v1006
      %v1131 = vpop.f32.mrb[0].mxu0
      %v1132 = vadd.f32 1e-05, %v1131
      %v1133 = vpop.f32.mrb[0].mxu0
      %1134 = vmatprep.mubr.f32.mxu0 0.0
      %1135 = vmatmul.mubr.f32.gmra.mrb[0].mxu0 %v1009
      %v1136 = vpop.f32.mrb[0].mxu0
      %v1137 = vadd.f32 1e-05, %v1136
      %v1138 = vpop.f32.mrb[0].mxu0
      %1139 = vmatprep.mubr.f32.mxu0 0.0
      %1140 = vmatmul.mubr.f32.gmra.mrb[0].mxu0 %v1012
      %v1141 = vpop.f32.mrb[0].mxu0
      %v1142 = vadd.f32 1e-05, %v1141
      %v1143 = vpop.f32.mrb[0].mxu0
      %1144 = vmatprep.mubr.f32.mxu0 0.0
      %1145 = vmatmul.mubr.f32.gmra.mrb[0].mxu0 %v1015
      %v1146 = vpop.f32.mrb[0].mxu0
      %v1147 = vadd.f32 1e-05, %v1146
      %v1148 = vpop.f32.mrb[0].mxu0
      %1149 = vmatprep.mubr.f32.mxu0 0.0
      %1150 = vmatmul.mubr.f32.gmra.mrb[0].mxu0 %v1018
      %v1151 = vpop.f32.mrb[0].mxu0
      %v1152 = vadd.f32 1e-05, %v1151
      %v1153 = vpop.f32.mrb[0].mxu0
      %1154 = vmatprep.mubr.f32.mxu0 0.0
      %1155 = vmatmul.mubr.f32.gmra.mrb[0].mxu0 %v1021
      %v1156 = vpop.f32.mrb[0].mxu0
      %v1157 = vadd.f32 1e-05, %v1156
      %v1158 = vpop.f32.mrb[0].mxu0
      %1159 = vmatprep.mubr.f32.mxu0 0.0
      %1160 = vmatmul.mubr.f32.gmra.mrb[0].mxu0 %v1024
      %v1161 = vpop.f32.mrb[0].mxu0
      %v1162 = vadd.f32 1e-05, %v1161
      %v1163 = vpop.f32.mrb[0].mxu0
      %1164 = vmatprep.mubr.f32.mxu0 0.0
      %1165 = vmatmul.mubr.f32.gmra.mrb[0].mxu0 %v1027
      %v1166 = vpop.f32.mrb[0].mxu0
      %v1167 = vadd.f32 1e-05, %v1166
      %v1168 = vpop.f32.mrb[0].mxu0
      %1169 = vmatprep.mubr.f32.mxu0 0.0
      %1170 = vmatmul.mubr.f32.gmra.mrb[0].mxu0 %v1030
      %v1171 = vpop.f32.mrb[0].mxu0
      %v1172 = vadd.f32 1e-05, %v1171
      %v1173 = vpop.f32.mrb[0].mxu0
      %1174 = vmatprep.mubr.f32.mxu0 0.0
      %1175 = vmatmul.mubr.f32.gmra.mrb[0].mxu0 %v1033
      %v1176 = vpop.f32.mrb[0].mxu0
      %v1177 = vadd.f32 1e-05, %v1176
      %v1178 = vpop.f32.mrb[0].mxu0
      %1179 = vdwg.mxu0
      %v1180 = vrsqrt.pop %v1102
      %v1181 = vrsqrt.pop %v1107
      %v1182 = vrsqrt.pop %v1112
      %v1183 = vrsqrt.pop %v1117
      %v1184 = vrsqrt.pop %v1122
      %v1185 = vrsqrt.pop %v1127
      %v1186 = vrsqrt.pop %v1132
      %v1187 = vrsqrt.pop %v1137
      %v1188 = vrsqrt.pop %v1142
      %v1189 = vrsqrt.pop %v1147
      %v1190 = vrsqrt.pop %v1152
      %v1191 = vrsqrt.pop %v1157
      %v1192 = vrsqrt.pop %v1162
      %v1193 = vrsqrt.pop %v1167
      %v1194 = vrsqrt.pop %v1172
      %v1195 = vrsqrt.pop %v1177
      %v1196 = vmul.f32 %v810, %v1180
      %v1197 = vmul.f32 %v811, %v1181
      %v1198 = vmul.f32 %v812, %v1182
      %v1199 = vmul.f32 %v813, %v1183
      %v1200 = vmul.f32 %v814, %v1184
      %v1201 = vmul.f32 %v815, %v1185
      %v1202 = vmul.f32 %v816, %v1186
      %v1203 = vmul.f32 %v817, %v1187
      %v1204 = vmul.f32 %v818, %v1188
      %v1205 = vmul.f32 %v819, %v1189
      %v1206 = vmul.f32 %v820, %v1190
      %v1207 = vmul.f32 %v821, %v1191
      %v1208 = vmul.f32 %v822, %v1192
      %v1209 = vmul.f32 %v823, %v1193
      %v1210 = vmul.f32 %v824, %v1194
      %v1211 = vmul.f32 %v825, %v1195
      %v1212 = vld [vmem:[%s2] sm:$0x1]
      %v1214 = vlaneseq
      %v1215 = vshrl.u32 %v1214, 7
      %v1216 = vsub.s32 0, %v1215
      %v1217 = vrot.slane %v1212, %v1216
      %v1219 = vmul.f32 %v1196, %v1217
      %v1220 = vmul.f32 %v1197, %v1217
      %v1221 = vmul.f32 %v1198, %v1217
      %v1222 = vmul.f32 %v1199, %v1217
      %v1223 = vmul.f32 %v1200, %v1217
      %v1224 = vmul.f32 %v1201, %v1217
      %v1225 = vmul.f32 %v1202, %v1217
      %v1226 = vmul.f32 %v1203, %v1217
      %v1227 = vmul.f32 %v1204, %v1217
      %v1228 = vmul.f32 %v1205, %v1217
      %v1229 = vmul.f32 %v1206, %v1217
      %v1230 = vmul.f32 %v1207, %v1217
      %v1231 = vmul.f32 %v1208, %v1217
      %v1232 = vmul.f32 %v1209, %v1217
      %v1233 = vmul.f32 %v1210, %v1217
      %v1234 = vmul.f32 %v1211, %v1217
      %v1235 = vld [vmem:[%s3] sm:$0x1]
      %v1237 = vlaneseq
      %v1238 = vshrl.u32 %v1237, 7
      %v1239 = vsub.s32 0, %v1238
      %v1240 = vrot.slane %v1235, %v1239
      %v1242 = vadd.f32 %v1219, %v1240
      %v1243 = vadd.f32 %v1220, %v1240
      %v1244 = vadd.f32 %v1221, %v1240
      %v1245 = vadd.f32 %v1222, %v1240
      %v1246 = vadd.f32 %v1223, %v1240
      %v1247 = vadd.f32 %v1224, %v1240
      %v1248 = vadd.f32 %v1225, %v1240
      %v1249 = vadd.f32 %v1226, %v1240
      %v1250 = vadd.f32 %v1227, %v1240
      %v1251 = vadd.f32 %v1228, %v1240
      %v1252 = vadd.f32 %v1229, %v1240
      %v1253 = vadd.f32 %v1230, %v1240
      %v1254 = vadd.f32 %v1231, %v1240
      %v1255 = vadd.f32 %v1232, %v1240
      %v1256 = vadd.f32 %v1233, %v1240
      %v1257 = vadd.f32 %v1234, %v1240
      %1258 = vst [vmem:[%s253] sm:$0xff] %v1242
      %1259 = vst [vmem:[%s253 + $0x8] sm:$0xff] %v1243
      %1260 = vst [vmem:[%s253 + $0x10] sm:$0xff] %v1244
      %1261 = vst [vmem:[%s253 + $0x18] sm:$0xff] %v1245
      %1262 = vst [vmem:[%s253 + $0x20] sm:$0xff] %v1246
      %1263 = vst [vmem:[%s253 + $0x28] sm:$0xff] %v1247
      %1264 = vst [vmem:[%s253 + $0x30] sm:$0xff] %v1248
      %1265 = vst [vmem:[%s253 + $0x38] sm:$0xff] %v1249
      %1266 = vst [vmem:[%s253 + $0x40] sm:$0xff] %v1250
      %1267 = vst [vmem:[%s253 + $0x48] sm:$0xff] %v1251
      %1268 = vst [vmem:[%s253 + $0x50] sm:$0xff] %v1252
      %1269 = vst [vmem:[%s253 + $0x58] sm:$0xff] %v1253
      %1270 = vst [vmem:[%s253 + $0x60] sm:$0xff] %v1254
      %1271 = vst [vmem:[%s253 + $0x68] sm:$0xff] %v1255
      %1272 = vst [vmem:[%s253 + $0x70] sm:$0xff] %v1256
      %1273 = vst [vmem:[%s253 + $0x78] sm:$0xff] %v1257
      %s1274 = smul.u32 16, %s17
      %p1275 = scmp.lt.s32.totalorder %s1274, 63
      %s1276 = scalar_select %p1275, %s1274, 63
      %s1277 = smul.addr %s1276, 8
      %s1278 = scalar_lea.vmem %s6, %s1277
      // Predicated region
      $region45: #{final_up.1} parent=43 // pred_check
        %p1279 = pneg %p166
      $region46: #{final_up.1} parent=43 // pred_check_branch
        %1281 = sbr.rel (%p1279) target = $region48
      $region47: #{final_up.1} parent=43 // pred_region
        %s1282 = smul.u32 16, %s17
      $region48: #{final_up.1} parent=43 // pred_fallthru
        _
    $region44: #{final_up.1} parent=5 // pred_fallthru
      _
    %p1283 = scmp.le.s32.totalorder 2, %s12
    // Predicated region
    $region49: #{final_up.1} parent=5 // pred_check
      %p1284 = pneg %p1283
    $region50: #{final_up.1} parent=5 // pred_check_branch
      %1286 = sbr.rel (%p1284) target = $region52
    $region51: #{final_up.1} parent=5 // pred_region
      %s1287 = ssub.s32 %s12, 2
      // Predicated region
      $region53: #{final_up.1} parent=51 // pred_check
        %p1288 = pneg %p172
      $region54: #{final_up.1} parent=51 // pred_check_branch
        %1290 = sbr.rel (%p1288) target = $region56
      $region55: #{final_up.1} parent=51 // pred_region
        %s1291 = smul.u32 16, %s18
        %p1292 = scmp.lt.s32.totalorder %s1291, 63
        %s1293 = scalar_select %p1292, %s1291, 63
        %s1294 = smul.addr %s1293, 8
        %s1295 = scalar_lea.vmem %s6, %s1294
      $region56: #{final_up.1} parent=51 // pred_fallthru
        _
    $region52: #{final_up.1} parent=5 // pred_fallthru
      _
  $region6: #{final_up.1} parent=0 // loop_footer
    %s16 = sadd.s32 1, %s12
  $region7: #{final_up.1} parent=0 // loop_footer_branch
    %11 = sbr.rel target = $region3
  $region8: #{final_up.1} parent=0 // loop_exit
    _

</llo_original>
